<compile_context>
chip_gen: v6e
topology: v6e:2x2x1
jax: 0.10.0
libtpu: 0.0.40
codegen_flags: <defaults>
</compile_context>

<pallas_src>
import numpy as np
import jax
import jax.numpy as jnp
from jax.experimental import pallas as pl
from jax.experimental.pallas import tpu as pltpu

_VMEM_LIMIT = 48 * 1024 * 1024


def gi_gemm_kernel(x_ref, scale_ref, shift_ref, wih_ref, bias_ref, gi_ref):
    """BN(scale/shift) + ReLU fused into the input-to-hidden GEMM for one T-chunk."""
    Tc, B, F = x_ref.shape
    xh = jnp.maximum(x_ref[...] * scale_ref[...] + shift_ref[...], 0.0)
    xh = xh.astype(jnp.bfloat16).reshape(Tc * B, F)
    gi = jnp.dot(xh, wih_ref[...], preferred_element_type=jnp.float32)
    gi = gi + bias_ref[...]                                   # folded b_ih + b_hh[r,z]
    gi_ref[...] = gi.reshape(Tc, B, -1).astype(gi_ref.dtype)  # bf16 to HBM


def gru_recurrence_kernel(lens_ref, gi_f_ref, gi_b_ref, whh_ref, bhn_ref,
                          out_f_ref, out_b_ref, h_ref):
    Tc, B, H = out_f_ref.shape          # padded: B % 8 == 0, H % 128 == 0
    c = pl.program_id(0)
    NC = pl.num_programs(0)

    @pl.when(c == 0)
    def _():
        h_ref[...] = jnp.zeros_like(h_ref)

    t0_f = c * Tc                        # global time offset of forward chunk
    t0_b = (NC - 1 - c) * Tc             # global time offset of backward chunk

    lens = lens_ref[...]                 # [B, 1] int32
    bhn_f = bhn_ref[0:1, :]              # [1, H] f32 (n-gate hidden bias, * r)
    bhn_b = bhn_ref[1:2, :]

    def gates(gi, gh, h, bhn):
        # PyTorch gate order (r, z, n); b_ih and b_hh[r,z] already folded in gi.
        r = jax.nn.sigmoid(gi[:, 0:H] + gh[:, 0:H])
        z = jax.nn.sigmoid(gi[:, H:2 * H] + gh[:, H:2 * H])
        n = jnp.tanh(gi[:, 2 * H:3 * H] + r * (gh[:, 2 * H:3 * H] + bhn))
        return (1.0 - z) * n + z * h

    def body(i, carry):
        hf, hb = carry
        ib = Tc - 1 - i                  # backward chunk walked in reverse
        gi_f = gi_f_ref[i].astype(jnp.float32)     # [B, 3H]
        gi_b = gi_b_ref[ib].astype(jnp.float32)

        # Single MXU dot per step: [B, 2H] @ block-diag [2H, 6H] -> [ghf | ghb].
        h_cat = jnp.concatenate([hf, hb], axis=-1).astype(jnp.bfloat16)
        gh = jnp.dot(h_cat, whh_ref[...], preferred_element_type=jnp.float32)

        hf_new = gates(gi_f, gh[:, 0:3 * H], hf, bhn_f)
        hb_new = gates(gi_b, gh[:, 3 * H:6 * H], hb, bhn_b)

        vf = lens > (t0_f + i)
        vb = lens > (t0_b + ib)
        out_f_ref[i] = jnp.where(vf, hf_new, 0.0).astype(out_f_ref.dtype)
        out_b_ref[ib] = jnp.where(vb, hb_new, 0.0).astype(out_b_ref.dtype)
        return jnp.where(vf, hf_new, hf), jnp.where(vb, hb_new, hb)

    hf, hb = jax.lax.fori_loop(0, Tc, body, (h_ref[0], h_ref[1]), unroll=2)
    h_ref[0] = hf
    h_ref[1] = hb


def _round_up(n, m):
    return (n + m - 1) // m * m


def batch_rnn_forward(x, seq_lengths, params, t_chunk=32):
    """x: [B, T, F] float32, seq_lengths: int array [B]. Returns [B, T_out, 2H]."""
    B, T, F = x.shape
    H = params["whh"].shape[-1] // 3
    lens_np = np.asarray(seq_lengths, dtype=np.int32)
    T_out = int(lens_np.max())

    B_pad = _round_up(B, 8)
    F_pad = _round_up(F, 128)
    H_pad = _round_up(H, 128)
    Tc = min(int(t_chunk), _round_up(T, 8))
    T_pad = _round_up(T, Tc)
    NC = T_pad // Tc

    # ---- BatchNorm1d stats: tiny two-pass XLA reduction on un-padded x ----
    xf = x.astype(jnp.float32)
    mean = xf.mean(axis=(0, 1))
    var = ((xf - mean) ** 2).mean(axis=(0, 1))                 # biased variance
    scale = params["gamma"].reshape(F) * jax.lax.rsqrt(var + 1e-5)
    shift = params["beta"].reshape(F) - mean * scale
    scale_p = jnp.pad(scale, (0, F_pad - F)).reshape(1, F_pad)
    shift_p = jnp.pad(shift, (0, F_pad - F)).reshape(1, F_pad)

    # ---- pad activations / lengths; go time-major ----
    x_p = jnp.pad(xf, ((0, B_pad - B), (0, T_pad - T), (0, F_pad - F)))
    x_tbf = jnp.transpose(x_p, (1, 0, 2))                      # [T_pad, B_pad, F_pad]
    lens = jnp.pad(jnp.asarray(lens_np), (0, B_pad - B)).reshape(B_pad, 1)

    # ---- pad params (per-gate zero padding keeps gate boundaries lane-aligned) ----
    def pad_gates(a):                                          # [..., 3H] -> [..., 3H_pad]
        lead = a.shape[:-1]
        a3 = a.reshape(lead + (3, H))
        a3 = jnp.pad(a3, [(0, 0)] * len(lead) + [(0, 0), (0, H_pad - H)])
        return a3.reshape(lead + (3 * H_pad,))

    wih = pad_gates(params["wih"])                             # [2, F, 3H_pad]
    wih = jnp.pad(wih, ((0, 0), (0, F_pad - F), (0, 0)))
    wih_cat = jnp.concatenate([wih[0], wih[1]], axis=-1).astype(jnp.bfloat16)  # [F_pad, 6H_pad]

    whh = pad_gates(params["whh"])                             # [2, H, 3H_pad]
    whh = jnp.pad(whh, ((0, 0), (0, H_pad - H), (0, 0))).astype(jnp.bfloat16)
    zeros = jnp.zeros((H_pad, 3 * H_pad), jnp.bfloat16)
    whh_blk = jnp.concatenate(                                 # block-diagonal [2H_pad, 6H_pad]
        [jnp.concatenate([whh[0], zeros], axis=-1),
         jnp.concatenate([zeros, whh[1]], axis=-1)], axis=0)

    bih = pad_gates(params["bih"])                             # [2, 1, 3H_pad]
    bhh = pad_gates(params["bhh"])
    bhh_rz = bhh.at[:, :, 2 * H_pad:].set(0.0)                 # n-gate hidden bias stays in-loop
    bias_fold = (bih + bhh_rz).astype(jnp.float32)
    bias_gi = jnp.concatenate([bias_fold[0], bias_fold[1]], axis=-1)   # [1, 6H_pad]
    bhn = bhh[:, 0, 2 * H_pad:3 * H_pad].astype(jnp.float32)           # [2, H_pad]

    # ---- kernel 1: BN+ReLU fused input GEMM -> bf16 GI in HBM ----
    gi = pl.pallas_call(
        gi_gemm_kernel,
        out_shape=jax.ShapeDtypeStruct((T_pad, B_pad, 6 * H_pad), jnp.bfloat16),
        grid=(NC,),
        in_specs=[
            pl.BlockSpec((Tc, B_pad, F_pad), lambda c: (c, 0, 0)),
            pl.BlockSpec((1, F_pad), lambda c: (0, 0)),
            pl.BlockSpec((1, F_pad), lambda c: (0, 0)),
            pl.BlockSpec((F_pad, 6 * H_pad), lambda c: (0, 0)),
            pl.BlockSpec((1, 6 * H_pad), lambda c: (0, 0)),
        ],
        out_specs=pl.BlockSpec((Tc, B_pad, 6 * H_pad), lambda c: (c, 0, 0)),
        compiler_params=pltpu.CompilerParams(
            dimension_semantics=("parallel",),
            vmem_limit_bytes=_VMEM_LIMIT),
    )(x_tbf, scale_p, shift_p, wih_cat, bias_gi)

    # ---- kernel 2: streaming bidirectional GRU recurrence over T-chunks ----
    out_f, out_b = pl.pallas_call(
        gru_recurrence_kernel,
        out_shape=(jax.ShapeDtypeStruct((T_pad, B_pad, H_pad), jnp.bfloat16),
                   jax.ShapeDtypeStruct((T_pad, B_pad, H_pad), jnp.bfloat16)),
        grid=(NC,),
        in_specs=[
            pl.BlockSpec((B_pad, 1), lambda c: (0, 0)),                          # lens
            pl.BlockSpec((Tc, B_pad, 3 * H_pad), lambda c: (c, 0, 0)),           # GI fwd half
            pl.BlockSpec((Tc, B_pad, 3 * H_pad), lambda c: (NC - 1 - c, 0, 1)),  # GI bwd half
            pl.BlockSpec((2 * H_pad, 6 * H_pad), lambda c: (0, 0)),              # block-diag W_hh
            pl.BlockSpec((2, H_pad), lambda c: (0, 0)),                          # b_hn
        ],
        out_specs=(pl.BlockSpec((Tc, B_pad, H_pad), lambda c: (c, 0, 0)),
                   pl.BlockSpec((Tc, B_pad, H_pad), lambda c: (NC - 1 - c, 0, 0))),
        scratch_shapes=[pltpu.VMEM((2, B_pad, H_pad), jnp.float32)],             # h_f / h_b carry
        compiler_params=pltpu.CompilerParams(
            dimension_semantics=("arbitrary",),
            vmem_limit_bytes=_VMEM_LIMIT),
    )(lens, gi, gi, whh_blk, bhn)

    out = jnp.concatenate([out_f[:T_out, :B, :H], out_b[:T_out, :B, :H]],
                          axis=-1).astype(jnp.float32)         # [T_out, B, 2H]
    return jnp.transpose(out, (1, 0, 2))                       # [B, T_out, 2H]


def init_params(key, input_size, hidden_size):
    """Deterministic synthetic parameters matching BatchRNN(input_size, hidden_size)."""
    F, H = input_size, hidden_size
    k = 1.0 / np.sqrt(H)                     # PyTorch GRU init range
    ks = jax.random.split(key, 6)
    return dict(
        gamma=jax.random.uniform(ks[0], (1, 1, F), jnp.float32, 0.9, 1.1),
        beta=jax.random.uniform(ks[1], (1, 1, F), jnp.float32, -0.1, 0.1),
        # weights stored pre-transposed: x @ W_ih^T  with PyTorch gate order (r, z, n)
        wih=jax.random.uniform(ks[2], (2, F, 3 * H), jnp.float32, -k, k),
        whh=jax.random.uniform(ks[3], (2, H, 3 * H), jnp.float32, -k, k),
        bih=jax.random.uniform(ks[4], (2, 1, 3 * H), jnp.float32, -k, k),
        bhh=jax.random.uniform(ks[5], (2, 1, 3 * H), jnp.float32, -k, k),
    )


def batch_rnn_reference(x, seq_lengths, params):
    """Pure-JAX f32 reference of the same forward semantics (for validation)."""
    lens_np = np.asarray(seq_lengths, dtype=np.int32)
    T_out = int(lens_np.max())
    B, T, F = x.shape
    H = params["whh"].shape[-1] // 3
    gamma = params["gamma"].reshape(F)
    beta = params["beta"].reshape(F)
    mean = x.mean(axis=(0, 1))
    var = ((x - mean) ** 2).mean(axis=(0, 1))
    xh = jnp.maximum((x - mean) / jnp.sqrt(var + 1e-5) * gamma + beta, 0.0)
    lens = jnp.asarray(lens_np)

    def run_dir(d, reverse):
        wih, whh = params["wih"][d], params["whh"][d]
        bih, bhh = params["bih"][d], params["bhh"][d]
        ts = jnp.arange(T_out)
        if reverse:
            ts = ts[::-1]
        xs = jnp.transpose(xh[:, ts, :], (1, 0, 2))            # [T_out, B, F]
        valids = (lens[None, :] > ts[:, None])[..., None]      # [T_out, B, 1]

        def step(h, inp):
            x_t, valid = inp
            gi = x_t @ wih + bih
            gh = h @ whh + bhh
            r = jax.nn.sigmoid(gi[:, :H] + gh[:, :H])
            z = jax.nn.sigmoid(gi[:, H:2 * H] + gh[:, H:2 * H])
            n = jnp.tanh(gi[:, 2 * H:] + r * gh[:, 2 * H:])
            h_new = (1.0 - z) * n + z * h
            h = jnp.where(valid, h_new, h)
            return h, jnp.where(valid, h, 0.0)

        _, outs = jax.lax.scan(step, jnp.zeros((B, H), jnp.float32), (xs, valids))
        if reverse:
            outs = outs[::-1]
        return outs

    out = jnp.concatenate([run_dir(0, False), run_dir(1, True)], axis=-1)
    return jnp.transpose(out, (1, 0, 2))


if __name__ == "__main__":
    B, T, F, H = 2, 10, 32, 32
    key = jax.random.PRNGKey(0)
    kx, kp = jax.random.split(key)
    x = jax.random.normal(kx, (B, T, F), jnp.float32)
    seq_lengths = np.array([8, 6], dtype=np.int32)   # max < T exercises trimming
    params = init_params(kp, F, H)

    # t_chunk=4 -> T_pad=12, 3 chunks: exercises the streamed multi-chunk path
    # (hidden-state carry across grid steps + reversed backward chunk order).
    out = batch_rnn_forward(x, seq_lengths, params, t_chunk=4)
    out = jax.block_until_ready(out)

    assert out.shape == (B, int(seq_lengths.max()), 2 * H), out.shape
    ref = batch_rnn_reference(x, seq_lengths, params)
    # bf16 matmul operands + bf16 GI/output storage (f32 accumulate/gates) ->
    # looser tolerance than pure f32.
    np.testing.assert_allclose(np.asarray(out), np.asarray(ref), atol=5e-2, rtol=5e-2)
    print("KERNEL_OK")
</pallas_src>

<mosaic_0001>
module attributes {stable_mosaic.version = 11 : i64} {
  func.func @gi_gemm_kernel(%arg0: i32, %arg1: memref<4x8x128xf32, #tpu.memory_space<vmem>>, %arg2: memref<1x128xf32, #tpu.memory_space<vmem>>, %arg3: memref<1x128xf32, #tpu.memory_space<vmem>>, %arg4: memref<128x768xbf16, #tpu.memory_space<vmem>>, %arg5: memref<1x768xf32, #tpu.memory_space<vmem>>, %arg6: memref<4x8x768xbf16, #tpu.memory_space<vmem>>) attributes {dimension_semantics = [#tpu.dimension_semantics<parallel>], iteration_bounds = array<i64: 3>, scalar_prefetch = 0 : i64, scratch_operands = 0 : i64, tpu.core_type = #tpu.core_type<tc>, window_params = [{transform_indices = @transform_0, window_bounds = array<i64: 4, 8, 128>}, {pipeline_mode = #tpu.pipeline_mode<synchronous>, transform_indices = @transform_1, window_bounds = array<i64: 1, 128>}, {pipeline_mode = #tpu.pipeline_mode<synchronous>, transform_indices = @transform_2, window_bounds = array<i64: 1, 128>}, {pipeline_mode = #tpu.pipeline_mode<synchronous>, transform_indices = @transform_3, window_bounds = array<i64: 128, 768>}, {pipeline_mode = #tpu.pipeline_mode<synchronous>, transform_indices = @transform_4, window_bounds = array<i64: 1, 768>}, {transform_indices = @transform_5, window_bounds = array<i64: 4, 8, 768>}]} {
    %c0 = arith.constant 0 : index
    %c0_0 = arith.constant 0 : index
    %c0_1 = arith.constant 0 : index
    %0 = vector.load %arg1[%c0, %c0_0, %c0_1] : memref<4x8x128xf32, #tpu.memory_space<vmem>>, vector<4x8x128xf32>
    %c0_2 = arith.constant 0 : index
    %c0_3 = arith.constant 0 : index
    %1 = vector.load %arg2[%c0_2, %c0_3] : memref<1x128xf32, #tpu.memory_space<vmem>>, vector<1x128xf32>
    %2 = vector.shape_cast %1 : vector<1x128xf32> to vector<1x1x128xf32>
    %3 = vector.broadcast %2 : vector<1x1x128xf32> to vector<4x8x128xf32>
    %4 = arith.mulf %0, %3 : vector<4x8x128xf32>
    %c0_4 = arith.constant 0 : index
    %c0_5 = arith.constant 0 : index
    %5 = vector.load %arg3[%c0_4, %c0_5] : memref<1x128xf32, #tpu.memory_space<vmem>>, vector<1x128xf32>
    %6 = vector.shape_cast %5 : vector<1x128xf32> to vector<1x1x128xf32>
    %7 = vector.broadcast %6 : vector<1x1x128xf32> to vector<4x8x128xf32>
    %8 = arith.addf %4, %7 : vector<4x8x128xf32>
    %cst = arith.constant 0.000000e+00 : f32
    %9 = vector.broadcast %cst : f32 to vector<4x8x128xf32>
    %10 = arith.maximumf %8, %9 : vector<4x8x128xf32>
    %11 = arith.truncf %10 : vector<4x8x128xf32> to vector<4x8x128xbf16>
    %12 = vector.shape_cast %11 : vector<4x8x128xbf16> to vector<32x128xbf16>
    %c0_6 = arith.constant 0 : index
    %c0_7 = arith.constant 0 : index
    %13 = vector.load %arg4[%c0_6, %c0_7] : memref<128x768xbf16, #tpu.memory_space<vmem>>, vector<128x768xbf16>
    %cst_8 = arith.constant dense<0.000000e+00> : vector<32x768xf32>
    %14 = tpu.matmul %12, %13, %cst_8 {dimension_numbers = #tpu.dot_dimension_numbers<[1], [0], [0], [1], [0, 0, 1, 1], [], []>} : vector<32x128xbf16>, vector<128x768xbf16>, vector<32x768xf32> -> vector<32x768xf32>
    %c0_9 = arith.constant 0 : index
    %c0_10 = arith.constant 0 : index
    %15 = vector.load %arg5[%c0_9, %c0_10] : memref<1x768xf32, #tpu.memory_space<vmem>>, vector<1x768xf32>
    %16 = vector.broadcast %15 : vector<1x768xf32> to vector<32x768xf32>
    %17 = arith.addf %14, %16 : vector<32x768xf32>
    %18 = vector.shape_cast %17 : vector<32x768xf32> to vector<4x8x768xf32>
    %19 = arith.truncf %18 : vector<4x8x768xf32> to vector<4x8x768xbf16>
    %c0_11 = arith.constant 0 : index
    %c0_12 = arith.constant 0 : index
    %c0_13 = arith.constant 0 : index
    %20 = vector.load %arg6[%c0_11, %c0_12, %c0_13] : memref<4x8x768xbf16, #tpu.memory_space<vmem>>, vector<4x8x768xbf16>
    tpu.vector_store %arg6[%c0_11, %c0_12, %c0_13], %19 {strides = array<i32>} : memref<4x8x768xbf16, #tpu.memory_space<vmem>>, vector<4x8x768xbf16>,
    return
  }
  func.func @transform_0(%arg0: i32) -> (i32, i32, i32) {
    %c0_i32 = arith.constant 0 : i32
    %c0_i32_0 = arith.constant 0 : i32
    %c0_i32_1 = arith.constant 0 : i32
    return %arg0, %c0_i32, %c0_i32_0 : i32, i32, i32
  }
  func.func @transform_1(%arg0: i32) -> (i32, i32) {
    %c0_i32 = arith.constant 0 : i32
    %c0_i32_0 = arith.constant 0 : i32
    %c0_i32_1 = arith.constant 0 : i32
    return %c0_i32, %c0_i32_0 : i32, i32
  }
  func.func @transform_2(%arg0: i32) -> (i32, i32) {
    %c0_i32 = arith.constant 0 : i32
    %c0_i32_0 = arith.constant 0 : i32
    %c0_i32_1 = arith.constant 0 : i32
    return %c0_i32, %c0_i32_0 : i32, i32
  }
  func.func @transform_3(%arg0: i32) -> (i32, i32) {
    %c0_i32 = arith.constant 0 : i32
    %c0_i32_0 = arith.constant 0 : i32
    %c0_i32_1 = arith.constant 0 : i32
    return %c0_i32, %c0_i32_0 : i32, i32
  }
  func.func @transform_4(%arg0: i32) -> (i32, i32) {
    %c0_i32 = arith.constant 0 : i32
    %c0_i32_0 = arith.constant 0 : i32
    %c0_i32_1 = arith.constant 0 : i32
    return %c0_i32, %c0_i32_0 : i32, i32
  }
  func.func @transform_5(%arg0: i32) -> (i32, i32, i32) {
    %c0_i32 = arith.constant 0 : i32
    %c0_i32_0 = arith.constant 0 : i32
    %c0_i32_1 = arith.constant 0 : i32
    return %arg0, %c0_i32, %c0_i32_0 : i32, i32, i32
  }
}

</mosaic_0001>

<llo_original>
// kernel: tpu_custom_call.1
$region0: #{tpu_custom_call.1}
  #allocation0 [shape = 'u32[]', space=smem, size = 0x4, offset = 0x4, fixed_abs, tag = 'smem constant byte address 0x4 - core index']
  #allocation1 [shape = 'u32[144,128]{1,0:T(1,128)}', space=vmem, size = 0x12000, scoped, tag = 'internal scratch']
  %s0 = inlined_call_operand.hbm [shape: f32[12,8,128], index: 0, kind: input, shape index: {}]
  %s1 = inlined_call_operand.vmem [shape: f32[1,128], index: 1, kind: input, shape index: {}]
  %s2 = inlined_call_operand.hbm [shape: f32[1,128], index: 2, kind: input, shape index: {}]
  %s3 = inlined_call_operand.hbm [shape: bf16[128,768], index: 3, kind: input, shape index: {}]
  %s4 = inlined_call_operand.vmem [shape: f32[1,768], index: 4, kind: input, shape index: {}]
  %s5 = inlined_call_operand.hbm [shape: bf16[12,8,768], index: 5, kind: output, shape index: {}]
  %s6 = sld [smem:[#allocation0]]
  $region65: #{tpu_custom_call.1} parent=0
    _
  %s8 = ssub.s32 1, %s6
  %s9 = scalar_select 0, %s8, %s6
  $region1: #{tpu_custom_call.1} parent=0
    #allocation2 [shape = 'u8[32768]{0}', space=vmem, size = 0x8000, scoped, tag = 'input window, operand 0']
    #allocation3 [shape = 's32[2]{0}', space=sflag, size = 0x8, scoped, tag = 'scoped memory for tpu_custom_call.1']
    #allocation4 [shape = 's32[2]{0}', space=sflag, size = 0x8, scoped, tag = 'scoped memory for tpu_custom_call.1']
    #allocation5 [shape = 'u8[512]{0}', space=vmem, size = 0x400, scoped, tag = 'input window, operand 2, single buffered']
    #allocation6 [shape = 's32[1]{0}', space=sflag, size = 0x4, scoped, tag = 'scoped memory for tpu_custom_call.1']
    #allocation7 [shape = 'u8[196608]{0}', space=vmem, size = 0x30000, scoped, tag = 'input window, operand 3, single buffered']
    #allocation8 [shape = 'u8[98304]{0}', space=vmem, size = 0x18000, scoped, tag = 'output window, operand 0']
    %10 = vsyncpa [#allocation3], 0
    %s11 = scalar_lea.sflag [#allocation3], 1
    %12 = vsyncpa %s11, 0
    %13 = vsyncpa [#allocation6], 0
    %14 = vsyncpa [#allocation4], 0
    %s15 = scalar_lea.sflag [#allocation4], 1
    %16 = vsyncpa %s15, 0
    loop: start=0, step=1, limit=5
    $region2: #{tpu_custom_call.1} parent=1 // loop_pre_header
      _
    $region3: #{tpu_custom_call.1} parent=1 // loop_header
      %s18 = sphi 0, %s22
      %p19 = scmp.ge.s32.totalorder %s18, 5
      %s28 = sphi 0, %s30
      %s31 = sphi 0, %s28
      %s32 = sphi 0, %s31
      %s48 = sphi 0, %s32
      %s52 = sphi 0, %s52
      %s54 = sphi 0, %s52
      %s55 = sphi 0, %s54
      %s69 = sphi 0, %s55
      %s73 = sphi 0, %s73
      %s75 = sphi 0, %s73
      %s76 = sphi 0, %s75
      %s90 = sphi 0, %s76
      %s94 = sphi 0, %s94
      %s96 = sphi 0, %s94
      %s97 = sphi 0, %s96
      %s111 = sphi 0, %s97
      %s115 = sphi 0, %s115
      %s117 = sphi 0, %s115
      %s118 = sphi 0, %s117
      %s132 = sphi 0, %s118
      %s138 = sphi 0, %s140
      %s141 = sphi 0, %s138
      %s142 = sphi 0, %s141
      %s158 = sphi 0, %s142
    $region4: #{tpu_custom_call.1} parent=1 // loop_header_branch
      %21 = sbr.rel (%p19) target = $region8
    $region5: #{tpu_custom_call.1} parent=1 // loop_body
      %s23 = ssub.s32 %s18, 1
      %s24 = ssub.s32 %s18, 2
      %s25 = sadd.s32 %s18, 1
      %s26 = ssub.s32 %s18, %s25
      %p27 = scmp.eq.s32.totalorder %s26, 0
      %s29 = sadd.s32 %s28, 1
      %s30 = scalar_select %p27, %s28, %s29
      %p33 = pneg %p27
      %p34 = scmp.eq.s32.totalorder %s18, 2
      %p35 = por %p33, %p34
      %p36 = scmp.ne.s32.totalorder %s28, %s31
      %p37 = scmp.eq.s32.totalorder %s18, 0
      %p38 = por %p36, %p37
      %p39 = scmp.ne.s32.totalorder %s28, %s31
      %p40 = scmp.eq.s32.totalorder %s23, 2
      %p41 = por %p39, %p40
      %p42 = scmp.ne.s32.totalorder %s31, %s32
      %p43 = scmp.eq.s32.totalorder %s23, 0
      %p44 = por %p42, %p43
      %p45 = scmp.ne.s32.totalorder %s31, %s32
      %p46 = scmp.eq.s32.totalorder %s24, 2
      %p47 = por %p45, %p46
      %p49 = scmp.ne.s32.totalorder %s32, %s48
      %p50 = scmp.eq.s32.totalorder %s24, 0
      %p51 = por %p49, %p50
      %s53 = sadd.s32 %s52, 1
      %p56 = scmp.eq.s32.totalorder %s18, 2
      %p57 = scmp.ne.s32.totalorder %s52, %s54
      %p58 = scmp.eq.s32.totalorder %s18, 0
      %p59 = por %p57, %p58
      %p60 = scmp.ne.s32.totalorder %s52, %s54
      %p61 = scmp.eq.s32.totalorder %s23, 2
      %p62 = por %p60, %p61
      %p63 = scmp.ne.s32.totalorder %s54, %s55
      %p64 = scmp.eq.s32.totalorder %s23, 0
      %p65 = por %p63, %p64
      %p66 = scmp.ne.s32.totalorder %s54, %s55
      %p67 = scmp.eq.s32.totalorder %s24, 2
      %p68 = por %p66, %p67
      %p70 = scmp.ne.s32.totalorder %s55, %s69
      %p71 = scmp.eq.s32.totalorder %s24, 0
      %p72 = por %p70, %p71
      %s74 = sadd.s32 %s73, 1
      %p77 = scmp.eq.s32.totalorder %s18, 2
      %p78 = scmp.ne.s32.totalorder %s73, %s75
      %p79 = scmp.eq.s32.totalorder %s18, 0
      %p80 = por %p78, %p79
      %p81 = scmp.ne.s32.totalorder %s73, %s75
      %p82 = scmp.eq.s32.totalorder %s23, 2
      %p83 = por %p81, %p82
      %p84 = scmp.ne.s32.totalorder %s75, %s76
      %p85 = scmp.eq.s32.totalorder %s23, 0
      %p86 = por %p84, %p85
      %p87 = scmp.ne.s32.totalorder %s75, %s76
      %p88 = scmp.eq.s32.totalorder %s24, 2
      %p89 = por %p87, %p88
      %p91 = scmp.ne.s32.totalorder %s76, %s90
      %p92 = scmp.eq.s32.totalorder %s24, 0
      %p93 = por %p91, %p92
      %s95 = sadd.s32 %s94, 1
      %p98 = scmp.eq.s32.totalorder %s18, 2
      %p99 = scmp.ne.s32.totalorder %s94, %s96
      %p100 = scmp.eq.s32.totalorder %s18, 0
      %p101 = por %p99, %p100
      %p102 = scmp.ne.s32.totalorder %s94, %s96
      %p103 = scmp.eq.s32.totalorder %s23, 2
      %p104 = por %p102, %p103
      %p105 = scmp.ne.s32.totalorder %s96, %s97
      %p106 = scmp.eq.s32.totalorder %s23, 0
      %p107 = por %p105, %p106
      %p108 = scmp.ne.s32.totalorder %s96, %s97
      %p109 = scmp.eq.s32.totalorder %s24, 2
      %p110 = por %p108, %p109
      %p112 = scmp.ne.s32.totalorder %s97, %s111
      %p113 = scmp.eq.s32.totalorder %s24, 0
      %p114 = por %p112, %p113
      %s116 = sadd.s32 %s115, 1
      %p119 = scmp.eq.s32.totalorder %s18, 2
      %p120 = scmp.ne.s32.totalorder %s115, %s117
      %p121 = scmp.eq.s32.totalorder %s18, 0
      %p122 = por %p120, %p121
      %p123 = scmp.ne.s32.totalorder %s115, %s117
      %p124 = scmp.eq.s32.totalorder %s23, 2
      %p125 = por %p123, %p124
      %p126 = scmp.ne.s32.totalorder %s117, %s118
      %p127 = scmp.eq.s32.totalorder %s23, 0
      %p128 = por %p126, %p127
      %p129 = scmp.ne.s32.totalorder %s117, %s118
      %p130 = scmp.eq.s32.totalorder %s24, 2
      %p131 = por %p129, %p130
      %p133 = scmp.ne.s32.totalorder %s118, %s132
      %p134 = scmp.eq.s32.totalorder %s24, 0
      %p135 = por %p133, %p134
      %s136 = ssub.s32 %s18, %s25
      %p137 = scmp.eq.s32.totalorder %s136, 0
      %s139 = sadd.s32 %s138, 1
      %s140 = scalar_select %p137, %s138, %s139
      %p143 = pneg %p137
      %p144 = scmp.eq.s32.totalorder %s18, 2
      %p145 = por %p143, %p144
      %p146 = scmp.ne.s32.totalorder %s138, %s141
      %p147 = scmp.eq.s32.totalorder %s18, 0
      %p148 = por %p146, %p147
      %p149 = scmp.ne.s32.totalorder %s138, %s141
      %p150 = scmp.eq.s32.totalorder %s23, 2
      %p151 = por %p149, %p150
      %p152 = scmp.ne.s32.totalorder %s141, %s142
      %p153 = scmp.eq.s32.totalorder %s23, 0
      %p154 = por %p152, %p153
      %p155 = scmp.ne.s32.totalorder %s141, %s142
      %p156 = scmp.eq.s32.totalorder %s24, 2
      %p157 = por %p155, %p156
      %p159 = scmp.ne.s32.totalorder %s142, %s158
      %p160 = scmp.eq.s32.totalorder %s24, 0
      %p161 = por %p159, %p160
      %p162 = scmp.le.s32.totalorder 1, %s18
      %p163 = scmp.lt.s32.totalorder %s18, 4
      %p164 = pnand %p162, %p163
      %p165 = pneg %p164
      // Predicated region
      $region9: #{tpu_custom_call.1} parent=5 // pred_check
        _
      $region10: #{tpu_custom_call.1} parent=5 // pred_check_branch
        %167 = sbr.rel (%p164) target = $region12
      $region11: #{tpu_custom_call.1} parent=5 // pred_region
        %s168 = ssub.s32 %s18, 1
        // Predicated region
        $region13: #{tpu_custom_call.1} parent=11 // pred_check
          %p169 = pneg %p65
        $region14: #{tpu_custom_call.1} parent=11 // pred_check_branch
          %171 = sbr.rel (%p169) target = $region16
        $region15: #{tpu_custom_call.1} parent=11 // pred_region
          _
        $region16: #{tpu_custom_call.1} parent=11 // pred_fallthru
          _
        // Predicated region
        $region17: #{tpu_custom_call.1} parent=11 // pred_check
          %p172 = pneg %p86
        $region18: #{tpu_custom_call.1} parent=11 // pred_check_branch
          %174 = sbr.rel (%p172) target = $region20
        $region19: #{tpu_custom_call.1} parent=11 // pred_region
          %s176 = ssub.s32 16, 16
          %177 = vsyncadd [#allocation6], %s176
          %s179 = sshll.u32 [#allocation5], 4
          %s180 = int_to_ptr.vmem [resolvable:$true] %s179
          %182 = dma.hbm_to_vmem [thread:$0]  %s2, 16, %s180, [#allocation6]
        $region20: #{tpu_custom_call.1} parent=11 // pred_fallthru
          _
        // Predicated region
        $region21: #{tpu_custom_call.1} parent=11 // pred_check
          %p183 = pneg %p107
        $region22: #{tpu_custom_call.1} parent=11 // pred_check_branch
          %185 = sbr.rel (%p183) target = $region24
        $region23: #{tpu_custom_call.1} parent=11 // pred_region
          %s187 = ssub.s32 6144, 6144
          %188 = vsyncadd [#allocation6], %s187
          %s189 = sshll.u32 [#allocation7], 4
          %s190 = int_to_ptr.vmem [resolvable:$true] %s189
          %195 = dma.hbm_to_vmem [thread:$0]  %s3, 6144, %s190, [#allocation6], 384, 384, 24
        $region24: #{tpu_custom_call.1} parent=11 // pred_fallthru
          _
        // Predicated region
        $region25: #{tpu_custom_call.1} parent=11 // pred_check
          %p196 = pneg %p128
        $region26: #{tpu_custom_call.1} parent=11 // pred_check_branch
          %198 = sbr.rel (%p196) target = $region28
        $region27: #{tpu_custom_call.1} parent=11 // pred_region
          _
        $region28: #{tpu_custom_call.1} parent=11 // pred_fallthru
          _
      $region12: #{tpu_custom_call.1} parent=5 // pred_fallthru
        _
      %p199 = scmp.lt.s32.totalorder %s18, 3
      // Predicated region
      $region29: #{tpu_custom_call.1} parent=5 // pred_check
        %p200 = pneg %p199
      $region30: #{tpu_custom_call.1} parent=5 // pred_check_branch
        %202 = sbr.rel (%p200) target = $region32
      $region31: #{tpu_custom_call.1} parent=5 // pred_region
        // Predicated region
        $region33: #{tpu_custom_call.1} parent=31 // pred_check
          %p203 = pneg %p38
        $region34: #{tpu_custom_call.1} parent=31 // pred_check_branch
          %205 = sbr.rel (%p203) target = $region36
        $region35: #{tpu_custom_call.1} parent=31 // pred_region
          %s206 = sand.u32 %s28, 1
          %s207 = scalar_lea.sflag [#allocation3], %s206
          %s208 = sand.u32 %s28, 1
          %s209 = smul.addr %s208, 32
          %s210 = scalar_lea.vmem [#allocation2], %s209
          %s211 = smul.u32 4, %s18
          %s213 = ssub.s32 512, 512
          %214 = vsyncadd %s207, %s213
          %s215 = smul.addr %s211, 128
          %s216 = scalar_lea.hbm %s0, %s215
          %s217 = sshll.u32 %s210, 4
          %s218 = int_to_ptr.vmem [resolvable:$true] %s217
          %223 = dma.hbm_to_vmem [thread:$0]  %s216, 512, %s218, %s207, 128, 128, 8
        $region36: #{tpu_custom_call.1} parent=31 // pred_fallthru
          _
      $region32: #{tpu_custom_call.1} parent=5 // pred_fallthru
        _
      %p224 = scmp.le.s32.totalorder 1, %s18
      %p225 = scmp.lt.s32.totalorder %s18, 4
      %p226 = pnand %p224, %p225
      %p227 = pneg %p226
      // Predicated region
      $region37: #{tpu_custom_call.1} parent=5 // pred_check
        _
      $region38: #{tpu_custom_call.1} parent=5 // pred_check_branch
        %229 = sbr.rel (%p226) target = $region40
      $region39: #{tpu_custom_call.1} parent=5 // pred_region
        %s230 = ssub.s32 %s18, 1
        %s231 = sand.u32 %s31, 1
        %s232 = scalar_lea.sflag [#allocation3], %s231
        %s233 = sand.u32 %s31, 1
        %s234 = smul.addr %s233, 32
        %s235 = scalar_lea.vmem [#allocation2], %s234
        // Predicated region
        $region41: #{tpu_custom_call.1} parent=39 // pred_check
          %p236 = pneg %p44
        $region42: #{tpu_custom_call.1} parent=39 // pred_check_branch
          %238 = sbr.rel (%p236) target = $region44
        $region43: #{tpu_custom_call.1} parent=39 // pred_region
          %239 = dma.done %s232, 512
        $region44: #{tpu_custom_call.1} parent=39 // pred_fallthru
          _
        // Predicated region
        $region45: #{tpu_custom_call.1} parent=39 // pred_check
          %p240 = pneg %p86
        $region46: #{tpu_custom_call.1} parent=39 // pred_check_branch
          %242 = sbr.rel (%p240) target = $region48
        $region47: #{tpu_custom_call.1} parent=39 // pred_region
          %243 = dma.done [#allocation6], 16
        $region48: #{tpu_custom_call.1} parent=39 // pred_fallthru
          _
        // Predicated region
        $region49: #{tpu_custom_call.1} parent=39 // pred_check
          %p244 = pneg %p107
        $region50: #{tpu_custom_call.1} parent=39 // pred_check_branch
          %246 = sbr.rel (%p244) target = $region52
        $region51: #{tpu_custom_call.1} parent=39 // pred_region
          %247 = dma.done [#allocation6], 6144
        $region52: #{tpu_custom_call.1} parent=39 // pred_fallthru
          _
        %s248 = sand.u32 %s31, 1
        %s249 = scalar_lea.sflag [#allocation3], %s248
        %s250 = sand.u32 %s31, 1
        %s251 = smul.addr %s250, 32
        %s252 = scalar_lea.vmem [#allocation2], %s251
        %p253 = pneg %p44
        %p254 = pneg %p41
        %p255 = pneg %p65
        %p256 = pneg %p62
        %p257 = pneg %p86
        %p258 = pneg %p83
        %p259 = pneg %p107
        %p260 = pneg %p104
        %p261 = pneg %p128
        %p262 = pneg %p125
        %p263 = pneg %p154
        %p264 = pneg %p151
        %s265 = sand.u32 %s141, 1
        %s266 = scalar_lea.sflag [#allocation4], %s265
        %s267 = sand.u32 %s141, 1
        %s268 = smul.addr %s267, 96
        %s269 = scalar_lea.vmem [#allocation8], %s268
        %s270 = smul.u32 4, %s23
        %s271 = smul.u32 4, %s23
        %v273 = vld [vmem:[%s235] sm:$0xff]
        %v274 = vld [vmem:[%s235 + $0x8] sm:$0xff]
        %v275 = vld [vmem:[%s235 + $0x10] sm:$0xff]
        %v276 = vld [vmem:[%s235 + $0x18] sm:$0xff]
        %v277 = vld [vmem:[%s1] sm:$0x1]
        %v279 = vlaneseq
        %v280 = vshrl.u32 %v279, 7
        %v281 = vsub.s32 0, %v280
        %v282 = vrot.slane %v277, %v281
        %v284 = vmul.f32 %v273, %v282
        %v285 = vmul.f32 %v274, %v282
        %v286 = vmul.f32 %v275, %v282
        %v287 = vmul.f32 %v276, %v282
        %v288 = vld [vmem:[#allocation5] sm:$0x1]
        %v290 = vlaneseq
        %v291 = vshrl.u32 %v290, 7
        %v292 = vsub.s32 0, %v291
        %v293 = vrot.slane %v288, %v292
        %v295 = vadd.f32 %v284, %v293
        %v296 = vadd.f32 %v285, %v293
        %v297 = vadd.f32 %v286, %v293
        %v298 = vadd.f32 %v287, %v293
        %v299 = vmax.f32 %v295, 0.0
        %v300 = vmax.f32 %v296, 0.0
        %v301 = vmax.f32 %v297, 0.0
        %v302 = vmax.f32 %v298, 0.0
        %v303 = vpack.c.bf16 %v299, %v299
        %v304 = vpack.c.bf16 %v300, %v300
        %v305 = vpack.c.bf16 %v301, %v301
        %v306 = vpack.c.bf16 %v302, %v302
        %v307 = vld [vmem:[#allocation7] sm:$0xff]
        %v308 = vld [vmem:[#allocation7 + $0x8] sm:$0xff]
        %v309 = vld [vmem:[#allocation7 + $0x10] sm:$0xff]
        %v310 = vld [vmem:[#allocation7 + $0x18] sm:$0xff]
        %v311 = vld [vmem:[#allocation7 + $0x20] sm:$0xff]
        %v312 = vld [vmem:[#allocation7 + $0x28] sm:$0xff]
        %v313 = vld [vmem:[#allocation7 + $0x30] sm:$0xff]
        %v314 = vld [vmem:[#allocation7 + $0x38] sm:$0xff]
        %v315 = vld [vmem:[#allocation7 + $0x40] sm:$0xff]
        %v316 = vld [vmem:[#allocation7 + $0x48] sm:$0xff]
        %v317 = vld [vmem:[#allocation7 + $0x50] sm:$0xff]
        %v318 = vld [vmem:[#allocation7 + $0x58] sm:$0xff]
        %v319 = vld [vmem:[#allocation7 + $0x60] sm:$0xff]
        %v320 = vld [vmem:[#allocation7 + $0x68] sm:$0xff]
        %v321 = vld [vmem:[#allocation7 + $0x70] sm:$0xff]
        %v322 = vld [vmem:[#allocation7 + $0x78] sm:$0xff]
        %v323 = vld [vmem:[#allocation7 + $0x80] sm:$0xff]
        %v324 = vld [vmem:[#allocation7 + $0x88] sm:$0xff]
        %v325 = vld [vmem:[#allocation7 + $0x90] sm:$0xff]
        %v326 = vld [vmem:[#allocation7 + $0x98] sm:$0xff]
        %v327 = vld [vmem:[#allocation7 + $0xa0] sm:$0xff]
        %v328 = vld [vmem:[#allocation7 + $0xa8] sm:$0xff]
        %v329 = vld [vmem:[#allocation7 + $0xb0] sm:$0xff]
        %v330 = vld [vmem:[#allocation7 + $0xb8] sm:$0xff]
        %v331 = vld [vmem:[#allocation7 + $0xc0] sm:$0xff]
        %v332 = vld [vmem:[#allocation7 + $0xc8] sm:$0xff]
        %v333 = vld [vmem:[#allocation7 + $0xd0] sm:$0xff]
        %v334 = vld [vmem:[#allocation7 + $0xd8] sm:$0xff]
        %v335 = vld [vmem:[#allocation7 + $0xe0] sm:$0xff]
        %v336 = vld [vmem:[#allocation7 + $0xe8] sm:$0xff]
        %v337 = vld [vmem:[#allocation7 + $0xf0] sm:$0xff]
        %v338 = vld [vmem:[#allocation7 + $0xf8] sm:$0xff]
        %v339 = vld [vmem:[#allocation7 + $0x100] sm:$0xff]
        %v340 = vld [vmem:[#allocation7 + $0x108] sm:$0xff]
        %v341 = vld [vmem:[#allocation7 + $0x110] sm:$0xff]
        %v342 = vld [vmem:[#allocation7 + $0x118] sm:$0xff]
        %v343 = vld [vmem:[#allocation7 + $0x120] sm:$0xff]
        %v344 = vld [vmem:[#allocation7 + $0x128] sm:$0xff]
        %v345 = vld [vmem:[#allocation7 + $0x130] sm:$0xff]
        %v346 = vld [vmem:[#allocation7 + $0x138] sm:$0xff]
        %v347 = vld [vmem:[#allocation7 + $0x140] sm:$0xff]
        %v348 = vld [vmem:[#allocation7 + $0x148] sm:$0xff]
        %v349 = vld [vmem:[#allocation7 + $0x150] sm:$0xff]
        %v350 = vld [vmem:[#allocation7 + $0x158] sm:$0xff]
        %v351 = vld [vmem:[#allocation7 + $0x160] sm:$0xff]
        %v352 = vld [vmem:[#allocation7 + $0x168] sm:$0xff]
        %v353 = vld [vmem:[#allocation7 + $0x170] sm:$0xff]
        %v354 = vld [vmem:[#allocation7 + $0x178] sm:$0xff]
        %v355 = vld [vmem:[%s4] sm:$0x3f]
        %v357 = vlaneseq
        %v358 = vshrl.u32 %v357, 7
        %v359 = vsub.s32 0, %v358
        %v360 = vrot.slane %v355, %v359
        %v361 = vlaneseq
        %v362 = vshrl.u32 %v361, 7
        %v363 = vsub.s32 1, %v362
        %v364 = vrot.slane %v355, %v363
        %v365 = vlaneseq
        %v366 = vshrl.u32 %v365, 7
        %v367 = vsub.s32 2, %v366
        %v368 = vrot.slane %v355, %v367
        %v369 = vlaneseq
        %v370 = vshrl.u32 %v369, 7
        %v371 = vsub.s32 3, %v370
        %v372 = vrot.slane %v355, %v371
        %v373 = vlaneseq
        %v374 = vshrl.u32 %v373, 7
        %v375 = vsub.s32 4, %v374
        %v376 = vrot.slane %v355, %v375
        %v377 = vlaneseq
        %v378 = vshrl.u32 %v377, 7
        %v379 = vsub.s32 5, %v378
        %v380 = vrot.slane %v355, %v379
        %v391 = vunpack.c.l.b16 %v303
        %v392 = vunpack.c.l.b16 %v304
        %v393 = vunpack.c.l.b16 %v305
        %v394 = vunpack.c.l.b16 %v306
        %v395 = vpack.c.b16 %v392, %v391
        %v396 = vpack.c.b16 %v394, %v393
        %v447 = vunpack.c.l.b16 %v307
        %v448 = vunpack.c.h.b16 %v307
        %v449 = vunpack.c.l.b16 %v308
        %v450 = vunpack.c.h.b16 %v308
        %v451 = vunpack.c.l.b16 %v309
        %v452 = vunpack.c.h.b16 %v309
        %v453 = vunpack.c.l.b16 %v310
        %v454 = vunpack.c.h.b16 %v310
        %v455 = vunpack.c.l.b16 %v311
        %v456 = vunpack.c.h.b16 %v311
        %v457 = vunpack.c.l.b16 %v312
        %v458 = vunpack.c.h.b16 %v312
        %v459 = vunpack.c.l.b16 %v313
        %v460 = vunpack.c.h.b16 %v313
        %v461 = vunpack.c.l.b16 %v314
        %v462 = vunpack.c.h.b16 %v314
        %v463 = vunpack.c.l.b16 %v315
        %v464 = vunpack.c.h.b16 %v315
        %v465 = vunpack.c.l.b16 %v316
        %v466 = vunpack.c.h.b16 %v316
        %v467 = vunpack.c.l.b16 %v317
        %v468 = vunpack.c.h.b16 %v317
        %v469 = vunpack.c.l.b16 %v318
        %v470 = vunpack.c.h.b16 %v318
        %v471 = vunpack.c.l.b16 %v319
        %v472 = vunpack.c.h.b16 %v319
        %v473 = vunpack.c.l.b16 %v320
        %v474 = vunpack.c.h.b16 %v320
        %v475 = vunpack.c.l.b16 %v321
        %v476 = vunpack.c.h.b16 %v321
        %v477 = vunpack.c.l.b16 %v322
        %v478 = vunpack.c.h.b16 %v322
        %v479 = vunpack.c.l.b16 %v323
        %v480 = vunpack.c.h.b16 %v323
        %v481 = vunpack.c.l.b16 %v324
        %v482 = vunpack.c.h.b16 %v324
        %v483 = vunpack.c.l.b16 %v325
        %v484 = vunpack.c.h.b16 %v325
        %v485 = vunpack.c.l.b16 %v326
        %v486 = vunpack.c.h.b16 %v326
        %v487 = vunpack.c.l.b16 %v327
        %v488 = vunpack.c.h.b16 %v327
        %v489 = vunpack.c.l.b16 %v328
        %v490 = vunpack.c.h.b16 %v328
        %v491 = vunpack.c.l.b16 %v329
        %v492 = vunpack.c.h.b16 %v329
        %v493 = vunpack.c.l.b16 %v330
        %v494 = vunpack.c.h.b16 %v330
        %v495 = vunpack.c.l.b16 %v331
        %v496 = vunpack.c.h.b16 %v331
        %v497 = vunpack.c.l.b16 %v332
        %v498 = vunpack.c.h.b16 %v332
        %v499 = vunpack.c.l.b16 %v333
        %v500 = vunpack.c.h.b16 %v333
        %v501 = vunpack.c.l.b16 %v334
        %v502 = vunpack.c.h.b16 %v334
        %v503 = vunpack.c.l.b16 %v335
        %v504 = vunpack.c.h.b16 %v335
        %v505 = vunpack.c.l.b16 %v336
        %v506 = vunpack.c.h.b16 %v336
        %v507 = vunpack.c.l.b16 %v337
        %v508 = vunpack.c.h.b16 %v337
        %v509 = vunpack.c.l.b16 %v338
        %v510 = vunpack.c.h.b16 %v338
        %v511 = vunpack.c.l.b16 %v339
        %v512 = vunpack.c.h.b16 %v339
        %v513 = vunpack.c.l.b16 %v340
        %v514 = vunpack.c.h.b16 %v340
        %v515 = vunpack.c.l.b16 %v341
        %v516 = vunpack.c.h.b16 %v341
        %v517 = vunpack.c.l.b16 %v342
        %v518 = vunpack.c.h.b16 %v342
        %v519 = vunpack.c.l.b16 %v343
        %v520 = vunpack.c.h.b16 %v343
        %v521 = vunpack.c.l.b16 %v344
        %v522 = vunpack.c.h.b16 %v344
        %v523 = vunpack.c.l.b16 %v345
        %v524 = vunpack.c.h.b16 %v345
        %v525 = vunpack.c.l.b16 %v346
        %v526 = vunpack.c.h.b16 %v346
        %v527 = vunpack.c.l.b16 %v347
        %v528 = vunpack.c.h.b16 %v347
        %v529 = vunpack.c.l.b16 %v348
        %v530 = vunpack.c.h.b16 %v348
        %v531 = vunpack.c.l.b16 %v349
        %v532 = vunpack.c.h.b16 %v349
        %v533 = vunpack.c.l.b16 %v350
        %v534 = vunpack.c.h.b16 %v350
        %v535 = vunpack.c.l.b16 %v351
        %v536 = vunpack.c.h.b16 %v351
        %v537 = vunpack.c.l.b16 %v352
        %v538 = vunpack.c.h.b16 %v352
        %v539 = vunpack.c.l.b16 %v353
        %v540 = vunpack.c.h.b16 %v353
        %v541 = vunpack.c.l.b16 %v354
        %v542 = vunpack.c.h.b16 %v354
        %v543 = vpack.c.b16 %v453, %v447
        %v544 = vpack.c.b16 %v454, %v448
        %v545 = vpack.c.b16 %v455, %v449
        %v546 = vpack.c.b16 %v456, %v450
        %v547 = vpack.c.b16 %v457, %v451
        %v548 = vpack.c.b16 %v458, %v452
        %v549 = vpack.c.b16 %v465, %v459
        %v550 = vpack.c.b16 %v466, %v460
        %v551 = vpack.c.b16 %v467, %v461
        %v552 = vpack.c.b16 %v468, %v462
        %v553 = vpack.c.b16 %v469, %v463
        %v554 = vpack.c.b16 %v470, %v464
        %v555 = vpack.c.b16 %v477, %v471
        %v556 = vpack.c.b16 %v478, %v472
        %v557 = vpack.c.b16 %v479, %v473
        %v558 = vpack.c.b16 %v480, %v474
        %v559 = vpack.c.b16 %v481, %v475
        %v560 = vpack.c.b16 %v482, %v476
        %v561 = vpack.c.b16 %v489, %v483
        %v562 = vpack.c.b16 %v490, %v484
        %v563 = vpack.c.b16 %v491, %v485
        %v564 = vpack.c.b16 %v492, %v486
        %v565 = vpack.c.b16 %v493, %v487
        %v566 = vpack.c.b16 %v494, %v488
        %v567 = vpack.c.b16 %v501, %v495
        %v568 = vpack.c.b16 %v502, %v496
        %v569 = vpack.c.b16 %v503, %v497
        %v570 = vpack.c.b16 %v504, %v498
        %v571 = vpack.c.b16 %v505, %v499
        %v572 = vpack.c.b16 %v506, %v500
        %v573 = vpack.c.b16 %v513, %v507
        %v574 = vpack.c.b16 %v514, %v508
        %v575 = vpack.c.b16 %v515, %v509
        %v576 = vpack.c.b16 %v516, %v510
        %v577 = vpack.c.b16 %v517, %v511
        %v578 = vpack.c.b16 %v518, %v512
        %v579 = vpack.c.b16 %v525, %v519
        %v580 = vpack.c.b16 %v526, %v520
        %v581 = vpack.c.b16 %v527, %v521
        %v582 = vpack.c.b16 %v528, %v522
        %v583 = vpack.c.b16 %v529, %v523
        %v584 = vpack.c.b16 %v530, %v524
        %v585 = vpack.c.b16 %v537, %v531
        %v586 = vpack.c.b16 %v538, %v532
        %v587 = vpack.c.b16 %v539, %v533
        %v588 = vpack.c.b16 %v540, %v534
        %v589 = vpack.c.b16 %v541, %v535
        %v590 = vpack.c.b16 %v542, %v536
        %639 = vmatprep.subr.bf16.mxu0 %v586
        %640 = vmatpush1.bf16.msra.mxu0 %v585
        %641 = vmatprep.subr.bf16.mxu0 %v580
        %642 = vmatpush1.bf16.msra.mxu0 %v579
        %643 = vmatprep.subr.bf16.mxu0 %v574
        %644 = vmatpush1.bf16.msra.mxu0 %v573
        %645 = vmatprep.subr.bf16.mxu0 %v568
        %646 = vmatpush1.bf16.msra.mxu0 %v567
        %647 = vmatprep.subr.bf16.mxu0 %v562
        %648 = vmatpush1.bf16.msra.mxu0 %v561
        %649 = vmatprep.subr.bf16.mxu0 %v556
        %650 = vmatpush1.bf16.msra.mxu0 %v555
        %651 = vmatprep.subr.bf16.mxu0 %v550
        %652 = vmatpush1.bf16.msra.mxu0 %v549
        %653 = vmatprep.subr.bf16.mxu0 %v544
        %654 = vmatpush1.bf16.msra.mxu0 %v543
        %655 = vmatprep.subr.bf16.mxu0 0
        %656 = vmatpush2.bf16.msra.mxu0 0
        %657 = vmatprep.subr.bf16.mxu0 0
        %658 = vmatpush2.bf16.msra.mxu0 0
        %659 = vmatprep.subr.bf16.mxu0 0
        %660 = vmatpush2.bf16.msra.mxu0 0
        %661 = vmatprep.subr.bf16.mxu0 0
        %662 = vmatpush2.bf16.msra.mxu0 0
        %663 = vmatprep.subr.bf16.mxu0 0
        %664 = vmatpush2.bf16.msra.mxu0 0
        %665 = vmatprep.subr.bf16.mxu0 0
        %666 = vmatpush2.bf16.msra.mxu0 0
        %667 = vmatprep.subr.bf16.mxu0 0
        %668 = vmatpush2.bf16.msra.mxu0 0
        %669 = vmatprep.subr.bf16.mxu0 0
        %670 = vmatpush2.bf16.msra.mxu0 0
        %671 = vmatprep.mubr.bf16.mxu0 0
        %672 = vmatmul.mubr.bf16.gmra.mxu0 %v395
        %v673 = vpop.f32.mrf.mxu0
        %v674 = vadd.f32 %v360, %v673
        %v675 = vpop.f32.mrf.mxu0
        %v676 = vadd.f32 %v364, %v675
        %v677 = vpop.f32.mrf.mxu0
        %v678 = vadd.f32 %v360, %v677
        %v679 = vpop.f32.mrf.mxu0
        %v680 = vadd.f32 %v364, %v679
        %681 = vmatprep.mubr.bf16.mxu0 0
        %682 = vmatmul.mubr.bf16.gmra.mxu0 %v396
        %v683 = vpop.f32.mrf.mxu0
        %v684 = vadd.f32 %v360, %v683
        %v685 = vpop.f32.mrf.mxu0
        %v686 = vadd.f32 %v364, %v685
        %v687 = vpop.f32.mrf.mxu0
        %v688 = vadd.f32 %v360, %v687
        %v689 = vpop.f32.mrf.mxu0
        %v690 = vadd.f32 %v364, %v689
        %691 = vdwg.mxu0
        %692 = vmatprep.subr.bf16.mxu0 %v588
        %693 = vmatpush1.bf16.msra.mxu0 %v587
        %694 = vmatprep.subr.bf16.mxu0 %v582
        %695 = vmatpush1.bf16.msra.mxu0 %v581
        %696 = vmatprep.subr.bf16.mxu0 %v576
        %697 = vmatpush1.bf16.msra.mxu0 %v575
        %698 = vmatprep.subr.bf16.mxu0 %v570
        %699 = vmatpush1.bf16.msra.mxu0 %v569
        %700 = vmatprep.subr.bf16.mxu0 %v564
        %701 = vmatpush1.bf16.msra.mxu0 %v563
        %702 = vmatprep.subr.bf16.mxu0 %v558
        %703 = vmatpush1.bf16.msra.mxu0 %v557
        %704 = vmatprep.subr.bf16.mxu0 %v552
        %705 = vmatpush1.bf16.msra.mxu0 %v551
        %706 = vmatprep.subr.bf16.mxu0 %v546
        %707 = vmatpush1.bf16.msra.mxu0 %v545
        %708 = vmatprep.subr.bf16.mxu0 0
        %709 = vmatpush2.bf16.msra.mxu0 0
        %710 = vmatprep.subr.bf16.mxu0 0
        %711 = vmatpush2.bf16.msra.mxu0 0
        %712 = vmatprep.subr.bf16.mxu0 0
        %713 = vmatpush2.bf16.msra.mxu0 0
        %714 = vmatprep.subr.bf16.mxu0 0
        %715 = vmatpush2.bf16.msra.mxu0 0
        %716 = vmatprep.subr.bf16.mxu0 0
        %717 = vmatpush2.bf16.msra.mxu0 0
        %718 = vmatprep.subr.bf16.mxu0 0
        %719 = vmatpush2.bf16.msra.mxu0 0
        %720 = vmatprep.subr.bf16.mxu0 0
        %721 = vmatpush2.bf16.msra.mxu0 0
        %722 = vmatprep.subr.bf16.mxu0 0
        %723 = vmatpush2.bf16.msra.mxu0 0
        %724 = vmatprep.mubr.bf16.mxu0 0
        %725 = vmatmul.mubr.bf16.gmra.mxu0 %v395
        %v726 = vpop.f32.mrf.mxu0
        %v727 = vadd.f32 %v368, %v726
        %v728 = vpop.f32.mrf.mxu0
        %v729 = vadd.f32 %v372, %v728
        %v730 = vpop.f32.mrf.mxu0
        %v731 = vadd.f32 %v368, %v730
        %v732 = vpop.f32.mrf.mxu0
        %v733 = vadd.f32 %v372, %v732
        %734 = vmatprep.mubr.bf16.mxu0 0
        %735 = vmatmul.mubr.bf16.gmra.mxu0 %v396
        %v736 = vpop.f32.mrf.mxu0
        %v737 = vadd.f32 %v368, %v736
        %v738 = vpop.f32.mrf.mxu0
        %v739 = vadd.f32 %v372, %v738
        %v740 = vpop.f32.mrf.mxu0
        %v741 = vadd.f32 %v368, %v740
        %v742 = vpop.f32.mrf.mxu0
        %v743 = vadd.f32 %v372, %v742
        %744 = vdwg.mxu0
        %745 = vmatprep.subr.bf16.mxu0 %v590
        %746 = vmatpush1.bf16.msra.mxu0 %v589
        %747 = vmatprep.subr.bf16.mxu0 %v584
        %748 = vmatpush1.bf16.msra.mxu0 %v583
        %749 = vmatprep.subr.bf16.mxu0 %v578
        %750 = vmatpush1.bf16.msra.mxu0 %v577
        %751 = vmatprep.subr.bf16.mxu0 %v572
        %752 = vmatpush1.bf16.msra.mxu0 %v571
        %753 = vmatprep.subr.bf16.mxu0 %v566
        %754 = vmatpush1.bf16.msra.mxu0 %v565
        %755 = vmatprep.subr.bf16.mxu0 %v560
        %756 = vmatpush1.bf16.msra.mxu0 %v559
        %757 = vmatprep.subr.bf16.mxu0 %v554
        %758 = vmatpush1.bf16.msra.mxu0 %v553
        %759 = vmatprep.subr.bf16.mxu0 %v548
        %760 = vmatpush1.bf16.msra.mxu0 %v547
        %761 = vmatprep.subr.bf16.mxu0 0
        %762 = vmatpush2.bf16.msra.mxu0 0
        %763 = vmatprep.subr.bf16.mxu0 0
        %764 = vmatpush2.bf16.msra.mxu0 0
        %765 = vmatprep.subr.bf16.mxu0 0
        %766 = vmatpush2.bf16.msra.mxu0 0
        %767 = vmatprep.subr.bf16.mxu0 0
        %768 = vmatpush2.bf16.msra.mxu0 0
        %769 = vmatprep.subr.bf16.mxu0 0
        %770 = vmatpush2.bf16.msra.mxu0 0
        %771 = vmatprep.subr.bf16.mxu0 0
        %772 = vmatpush2.bf16.msra.mxu0 0
        %773 = vmatprep.subr.bf16.mxu0 0
        %774 = vmatpush2.bf16.msra.mxu0 0
        %775 = vmatprep.subr.bf16.mxu0 0
        %776 = vmatpush2.bf16.msra.mxu0 0
        %777 = vmatprep.mubr.bf16.mxu0 0
        %778 = vmatmul.mubr.bf16.gmra.mxu0 %v395
        %v779 = vpop.f32.mrf.mxu0
        %v780 = vadd.f32 %v376, %v779
        %v781 = vpop.f32.mrf.mxu0
        %v782 = vadd.f32 %v380, %v781
        %v783 = vpop.f32.mrf.mxu0
        %v784 = vadd.f32 %v376, %v783
        %v785 = vpop.f32.mrf.mxu0
        %v786 = vadd.f32 %v380, %v785
        %787 = vmatprep.mubr.bf16.mxu0 0
        %788 = vmatmul.mubr.bf16.gmra.mxu0 %v396
        %v789 = vpop.f32.mrf.mxu0
        %v790 = vadd.f32 %v376, %v789
        %v791 = vpop.f32.mrf.mxu0
        %v792 = vadd.f32 %v380, %v791
        %v793 = vpop.f32.mrf.mxu0
        %v794 = vadd.f32 %v376, %v793
        %v795 = vpop.f32.mrf.mxu0
        %v796 = vadd.f32 %v380, %v795
        %797 = vdwg.mxu0
        %v798 = vpack.c.bf16 %v674, %v674
        %v799 = vpack.c.bf16 %v676, %v676
        %v800 = vpack.c.bf16 %v727, %v727
        %v801 = vpack.c.bf16 %v729, %v729
        %v802 = vpack.c.bf16 %v780, %v780
        %v803 = vpack.c.bf16 %v782, %v782
        %v804 = vpack.c.bf16 %v678, %v678
        %v805 = vpack.c.bf16 %v680, %v680
        %v806 = vpack.c.bf16 %v731, %v731
        %v807 = vpack.c.bf16 %v733, %v733
        %v808 = vpack.c.bf16 %v784, %v784
        %v809 = vpack.c.bf16 %v786, %v786
        %v810 = vpack.c.bf16 %v684, %v684
        %v811 = vpack.c.bf16 %v686, %v686
        %v812 = vpack.c.bf16 %v737, %v737
        %v813 = vpack.c.bf16 %v739, %v739
        %v814 = vpack.c.bf16 %v790, %v790
        %v815 = vpack.c.bf16 %v792, %v792
        %v816 = vpack.c.bf16 %v688, %v688
        %v817 = vpack.c.bf16 %v690, %v690
        %v818 = vpack.c.bf16 %v741, %v741
        %v819 = vpack.c.bf16 %v743, %v743
        %v820 = vpack.c.bf16 %v794, %v794
        %v821 = vpack.c.bf16 %v796, %v796
        %v846 = vunpack.c.l.b16 %v798
        %v847 = vunpack.c.l.b16 %v799
        %v848 = vunpack.c.l.b16 %v800
        %v849 = vunpack.c.l.b16 %v801
        %v850 = vunpack.c.l.b16 %v802
        %v851 = vunpack.c.l.b16 %v803
        %v852 = vunpack.c.l.b16 %v804
        %v853 = vunpack.c.l.b16 %v805
        %v854 = vunpack.c.l.b16 %v806
        %v855 = vunpack.c.l.b16 %v807
        %v856 = vunpack.c.l.b16 %v808
        %v857 = vunpack.c.l.b16 %v809
        %v858 = vunpack.c.l.b16 %v810
        %v859 = vunpack.c.l.b16 %v811
        %v860 = vunpack.c.l.b16 %v812
        %v861 = vunpack.c.l.b16 %v813
        %v862 = vunpack.c.l.b16 %v814
        %v863 = vunpack.c.l.b16 %v815
        %v864 = vunpack.c.l.b16 %v816
        %v865 = vunpack.c.l.b16 %v817
        %v866 = vunpack.c.l.b16 %v818
        %v867 = vunpack.c.l.b16 %v819
        %v868 = vunpack.c.l.b16 %v820
        %v869 = vunpack.c.l.b16 %v821
        %v870 = vpack.c.b16 %v847, %v846
        %v871 = vpack.c.b16 %v849, %v848
        %v872 = vpack.c.b16 %v851, %v850
        %v873 = vpack.c.b16 %v853, %v852
        %v874 = vpack.c.b16 %v855, %v854
        %v875 = vpack.c.b16 %v857, %v856
        %v876 = vpack.c.b16 %v859, %v858
        %v877 = vpack.c.b16 %v861, %v860
        %v878 = vpack.c.b16 %v863, %v862
        %v879 = vpack.c.b16 %v865, %v864
        %v880 = vpack.c.b16 %v867, %v866
        %v881 = vpack.c.b16 %v869, %v868
        %894 = vst [vmem:[%s269] sm:$0xff] %v870
        %895 = vst [vmem:[%s269 + $0x8] sm:$0xff] %v871
        %896 = vst [vmem:[%s269 + $0x10] sm:$0xff] %v872
        %897 = vst [vmem:[%s269 + $0x18] sm:$0xff] %v873
        %898 = vst [vmem:[%s269 + $0x20] sm:$0xff] %v874
        %899 = vst [vmem:[%s269 + $0x28] sm:$0xff] %v875
        %900 = vst [vmem:[%s269 + $0x30] sm:$0xff] %v876
        %901 = vst [vmem:[%s269 + $0x38] sm:$0xff] %v877
        %902 = vst [vmem:[%s269 + $0x40] sm:$0xff] %v878
        %903 = vst [vmem:[%s269 + $0x48] sm:$0xff] %v879
        %904 = vst [vmem:[%s269 + $0x50] sm:$0xff] %v880
        %905 = vst [vmem:[%s269 + $0x58] sm:$0xff] %v881
        %s906 = sand.u32 %s141, 1
        %s907 = scalar_lea.sflag [#allocation4], %s906
        %s908 = sand.u32 %s141, 1
        %s909 = smul.addr %s908, 96
        %s910 = scalar_lea.vmem [#allocation8], %s909
        // Predicated region
        $region53: #{tpu_custom_call.1} parent=39 // pred_check
          %p911 = pneg %p151
        $region54: #{tpu_custom_call.1} parent=39 // pred_check_branch
          %913 = sbr.rel (%p911) target = $region56
        $region55: #{tpu_custom_call.1} parent=39 // pred_region
          %s914 = smul.u32 4, %s23
          %s916 = ssub.s32 1536, 1536
          %917 = vsyncadd %s907, %s916
          %s918 = smul.addr %s914, 6
          %s919 = smul.addr %s918, 64
          %s920 = scalar_lea.hbm %s5, %s919
          %s921 = sshll.u32 %s910, 4
          %s922 = int_to_ptr.vmem [resolvable:$true] %s921
          %927 = dma.vmem_to_hbm [thread:$0]  %s922, 1536, %s920, %s907, 384, 384, 24
        $region56: #{tpu_custom_call.1} parent=39 // pred_fallthru
          _
      $region40: #{tpu_custom_call.1} parent=5 // pred_fallthru
        _
      %p928 = scmp.le.s32.totalorder 2, %s18
      // Predicated region
      $region57: #{tpu_custom_call.1} parent=5 // pred_check
        %p929 = pneg %p928
      $region58: #{tpu_custom_call.1} parent=5 // pred_check_branch
        %931 = sbr.rel (%p929) target = $region60
      $region59: #{tpu_custom_call.1} parent=5 // pred_region
        %s932 = ssub.s32 %s18, 2
        // Predicated region
        $region61: #{tpu_custom_call.1} parent=59 // pred_check
          %p933 = pneg %p157
        $region62: #{tpu_custom_call.1} parent=59 // pred_check_branch
          %935 = sbr.rel (%p933) target = $region64
        $region63: #{tpu_custom_call.1} parent=59 // pred_region
          %s936 = sand.u32 %s142, 1
          %s937 = scalar_lea.sflag [#allocation4], %s936
          %s938 = sand.u32 %s142, 1
          %s939 = smul.addr %s938, 96
          %s940 = scalar_lea.vmem [#allocation8], %s939
          %941 = dma.done %s937, 1536
        $region64: #{tpu_custom_call.1} parent=59 // pred_fallthru
          _
      $region60: #{tpu_custom_call.1} parent=5 // pred_fallthru
        _
    $region6: #{tpu_custom_call.1} parent=1 // loop_footer
      %s22 = sadd.s32 1, %s18
    $region7: #{tpu_custom_call.1} parent=1 // loop_footer_branch
      %17 = sbr.rel target = $region3
    $region8: #{tpu_custom_call.1} parent=1 // loop_exit
      _
    %942 = vsyncpa [#allocation3], 1
    %s943 = scalar_lea.sflag [#allocation3], 1
    %944 = vsyncpa %s943, 1
    %945 = vsyncpa [#allocation6], 1
    %946 = vsyncpa [#allocation4], 1
    %s947 = scalar_lea.sflag [#allocation4], 1
    %948 = vsyncpa %s947, 1

</llo_original>
